<compile_context>
chip_gen: v7x
topology: tpu7x:2x2x1
jax: 0.10.0
libtpu: 0.0.40
codegen_flags: <defaults>
</compile_context>

<pallas_src>
from functools import partial

import jax
import jax.numpy as jnp
from jax.experimental import pallas as pl
from jax.experimental.pallas import tpu as pltpu

_LANE = 128


def _quantile_loss_kernel(q_ref, preds_ref, target_ref, out_ref, acc_ref, *, batch_size):
    i = pl.program_id(0)

    # Zero the resident per-lane accumulator on the first tile.
    @pl.when(i == 0)
    def _():
        acc_ref[...] = jnp.zeros_like(acc_ref)

    preds = preds_ref[...].astype(jnp.float32)     # (TR, 128)
    target = target_ref[...].astype(jnp.float32)   # (TR, 128)
    q = q_ref[...].astype(jnp.float32)             # (1, 128) or (TR, 128)

    errors = target - preds                        # (TR, 128)
    # pinball = max((q-1)*e, q*e) == q*e + max(-e, 0)
    pinball = q * errors + jnp.maximum(-errors, 0.0)

    # Reduce only over sublanes per step; keep per-lane partials resident in VMEM.
    acc_ref[...] += jnp.sum(pinball, axis=0, keepdims=True)   # (1, 128)

    # Finalize: cross-lane reduce + mean over the batch, single output write.
    @pl.when(i == pl.num_programs(0) - 1)
    def _():
        out_ref[...] = jnp.sum(acc_ref[...], keepdims=True) * (1.0 / batch_size)


def quantile_loss(preds, target, quantiles, *, tile_rows=1024):
    """preds: (B, Q), target: (B,), quantiles: (Q,). Returns scalar f32 loss."""
    B, Q = preds.shape
    assert target.shape[0] == B

    N = B * Q

    # Lane-dense flat views (row-major (B, Q) -> flat -> (R, 128)).
    preds_flat = preds.reshape(-1)
    target_flat = jnp.broadcast_to(target[:, None], (B, Q)).reshape(-1)

    # Packed-row count and tile sizing (handle remainders by zero-padding, never by
    # shrinking tiles below what fits).
    rows = pl.cdiv(N, _LANE)
    tr = max(1, min(tile_rows, rows))
    rows_pad = pl.cdiv(rows, tr) * tr
    n_pad = rows_pad * _LANE
    pad = n_pad - N
    if pad:
        preds_flat = jnp.pad(preds_flat, (0, pad))
        target_flat = jnp.pad(target_flat, (0, pad))
    preds2d = preds_flat.reshape(rows_pad, _LANE)
    target2d = target_flat.reshape(rows_pad, _LANE)

    q = jnp.asarray(quantiles, dtype=jnp.float32).reshape(-1)
    if _LANE % Q == 0:
        # Quantile pattern is lane-periodic and identical for every packed row.
        q2d = jnp.tile(q, _LANE // Q).reshape(1, _LANE)
        q_spec = pl.BlockSpec((1, _LANE), lambda i: (0, 0))
    else:
        # General fallback: full per-element quantile array in the same flat layout.
        q_flat = jnp.tile(q, B)
        if pad:
            q_flat = jnp.pad(q_flat, (0, pad))
        q2d = q_flat.reshape(rows_pad, _LANE)
        q_spec = pl.BlockSpec((tr, _LANE), lambda i: (i, 0))

    grid = (rows_pad // tr,)

    out = pl.pallas_call(
        partial(_quantile_loss_kernel, batch_size=B),
        out_shape=jax.ShapeDtypeStruct((1, 1), jnp.float32),
        grid_spec=pltpu.PrefetchScalarGridSpec(
            num_scalar_prefetch=0,
            grid=grid,
            in_specs=[
                q_spec,                                           # quantile lane pattern
                pl.BlockSpec((tr, _LANE), lambda i: (i, 0)),      # preds tile
                pl.BlockSpec((tr, _LANE), lambda i: (i, 0)),      # target tile
            ],
            out_specs=pl.BlockSpec((1, 1), lambda i: (0, 0)),     # scalar, written once
            scratch_shapes=[pltpu.VMEM((1, _LANE), jnp.float32)],  # per-lane partial sums
        ),
        compiler_params=pltpu.CompilerParams(
            dimension_semantics=("arbitrary",),  # reduction axis with resident accumulator
        ),
    )(q2d, preds2d, target2d)
    return out[0, 0]


def quantile_loss_ref(preds, target, quantiles):
    """Pure-JAX reference matching the PyTorch module."""
    q = jnp.asarray(quantiles, dtype=jnp.float32)[None, :]                 # (1, Q)
    errors = target[:, None].astype(jnp.float32) - preds.astype(jnp.float32)
    loss = jnp.maximum((q - 1.0) * errors, q * errors)                     # (B, Q)
    return jnp.mean(jnp.sum(loss, axis=1))


if __name__ == "__main__":
    # Deterministic "module init": quantile levels (the module's only config).
    quantiles = [0.1, 0.25, 0.5, 0.9]
    Q = len(quantiles)
    B = 16

    key = jax.random.PRNGKey(0)
    kp, kt = jax.random.split(key)
    preds = jax.random.normal(kp, (B, Q), dtype=jnp.float32)
    target = jax.random.normal(kt, (B,), dtype=jnp.float32)

    out = quantile_loss(preds, target, quantiles)
    out = jax.block_until_ready(out)

    ref = quantile_loss_ref(preds, target, quantiles)
    assert jnp.allclose(out, ref, rtol=1e-5, atol=1e-5), (out, ref)

    # Also exercise a larger batch with a remainder (tail-padding path, multi-step grid).
    B2 = 3000
    kp2, kt2 = jax.random.split(jax.random.PRNGKey(1))
    preds2 = jax.random.normal(kp2, (B2, Q), dtype=jnp.float32)
    target2 = jax.random.normal(kt2, (B2,), dtype=jnp.float32)
    out2 = jax.block_until_ready(quantile_loss(preds2, target2, quantiles, tile_rows=32))
    ref2 = quantile_loss_ref(preds2, target2, quantiles)
    assert jnp.allclose(out2, ref2, rtol=1e-5, atol=1e-5), (out2, ref2)

    print("KERNEL_OK")
</pallas_src>

<mosaic_0001>
module attributes {stable_mosaic.version = 11 : i64} {
  func.func @_quantile_loss_kernel(%arg0: i32, %arg1: memref<1x128xf32, #tpu.memory_space<vmem>>, %arg2: memref<1x128xf32, #tpu.memory_space<vmem>>, %arg3: memref<1x128xf32, #tpu.memory_space<vmem>>, %arg4: memref<1x1xf32, #tpu.memory_space<vmem>>, %arg5: memref<1x128xf32, #tpu.memory_space<vmem>>) attributes {dimension_semantics = [#tpu.dimension_semantics<arbitrary>], iteration_bounds = array<i64: 1>, scalar_prefetch = 0 : i64, scratch_operands = 1 : i64, tpu.core_type = #tpu.core_type<tc>, window_params = [{pipeline_mode = #tpu.pipeline_mode<synchronous>, transform_indices = @transform_0, window_bounds = array<i64: 1, 128>}, {transform_indices = @transform_1, window_bounds = array<i64: 1, 128>}, {transform_indices = @transform_2, window_bounds = array<i64: 1, 128>}, {pipeline_mode = #tpu.pipeline_mode<synchronous>, transform_indices = @transform_3, window_bounds = array<i64: 1, 1>}]} {
    %c0_i32 = arith.constant 0 : i32
    %0 = arith.cmpi eq, %arg0, %c0_i32 : i32
    %1 = arith.extui %0 : i1 to i32
    %c0_i32_0 = arith.constant 0 : i32
    %2 = arith.cmpi ne, %1, %c0_i32_0 : i32
    scf.if %2 {
      %cst_14 = arith.constant 0.000000e+00 : f32
      %21 = vector.broadcast %cst_14 : f32 to vector<1x128xf32>
      %c0_15 = arith.constant 0 : index
      %c0_16 = arith.constant 0 : index
      %22 = vector.load %arg5[%c0_15, %c0_16] : memref<1x128xf32, #tpu.memory_space<vmem>>, vector<1x128xf32>
      tpu.vector_store %arg5[%c0_15, %c0_16], %21 {strides = array<i32>} : memref<1x128xf32, #tpu.memory_space<vmem>>, vector<1x128xf32>,
    } else {
    }
    %c0 = arith.constant 0 : index
    %c0_1 = arith.constant 0 : index
    %3 = vector.load %arg2[%c0, %c0_1] : memref<1x128xf32, #tpu.memory_space<vmem>>, vector<1x128xf32>
    %c0_2 = arith.constant 0 : index
    %c0_3 = arith.constant 0 : index
    %4 = vector.load %arg3[%c0_2, %c0_3] : memref<1x128xf32, #tpu.memory_space<vmem>>, vector<1x128xf32>
    %c0_4 = arith.constant 0 : index
    %c0_5 = arith.constant 0 : index
    %5 = vector.load %arg1[%c0_4, %c0_5] : memref<1x128xf32, #tpu.memory_space<vmem>>, vector<1x128xf32>
    %6 = arith.subf %4, %3 : vector<1x128xf32>
    %7 = arith.mulf %5, %6 : vector<1x128xf32>
    %cst = arith.constant 0.000000e+00 : f32
    %8 = vector.broadcast %cst : f32 to vector<1x128xf32>
    %9 = arith.subf %8, %6 : vector<1x128xf32>
    %cst_6 = arith.constant 0.000000e+00 : f32
    %10 = vector.broadcast %cst_6 : f32 to vector<1x128xf32>
    %11 = arith.maximumf %9, %10 : vector<1x128xf32>
    %12 = arith.addf %7, %11 : vector<1x128xf32>
    %c0_7 = arith.constant 0 : index
    %c0_8 = arith.constant 0 : index
    %13 = vector.load %arg5[%c0_7, %c0_8] : memref<1x128xf32, #tpu.memory_space<vmem>>, vector<1x128xf32>
    %cst_9 = arith.constant dense<0.000000e+00> : vector<128xf32>
    %14 = vector.multi_reduction <add>, %12, %cst_9 [0] : vector<1x128xf32> to vector<128xf32>
    %15 = vector.shape_cast %14 : vector<128xf32> to vector<1x128xf32>
    %16 = arith.addf %13, %15 : vector<1x128xf32>
    %c0_10 = arith.constant 0 : index
    %c0_11 = arith.constant 0 : index
    %17 = vector.load %arg5[%c0_10, %c0_11] : memref<1x128xf32, #tpu.memory_space<vmem>>, vector<1x128xf32>
    tpu.vector_store %arg5[%c0_10, %c0_11], %16 {strides = array<i32>} : memref<1x128xf32, #tpu.memory_space<vmem>>, vector<1x128xf32>,
    %c0_i32_12 = arith.constant 0 : i32
    %18 = arith.cmpi eq, %arg0, %c0_i32_12 : i32
    %19 = arith.extui %18 : i1 to i32
    %c0_i32_13 = arith.constant 0 : i32
    %20 = arith.cmpi ne, %19, %c0_i32_13 : i32
    scf.if %20 {
      %c0_14 = arith.constant 0 : index
      %c0_15 = arith.constant 0 : index
      %21 = vector.load %arg5[%c0_14, %c0_15] : memref<1x128xf32, #tpu.memory_space<vmem>>, vector<1x128xf32>
      %22 = vector.shape_cast %21 : vector<1x128xf32> to vector<1x1x128xf32>
      %cst_16 = arith.constant dense<0.000000e+00> : vector<1xf32>
      %23 = vector.multi_reduction <add>, %22, %cst_16 [1, 2] : vector<1x1x128xf32> to vector<1xf32>
      %24 = vector.shape_cast %23 : vector<1xf32> to vector<1x1x1xf32>
      %25 = vector.extract %24[0, 0, 0] : f32 from vector<1x1x1xf32>
      %26 = vector.broadcast %25 : f32 to vector<1x1xf32>
      %cst_17 = arith.constant 6.250000e-02 : f32
      %27 = vector.broadcast %cst_17 : f32 to vector<1x1xf32>
      %28 = arith.mulf %26, %27 : vector<1x1xf32>
      %c0_18 = arith.constant 0 : index
      %c0_19 = arith.constant 0 : index
      %29 = vector.load %arg4[%c0_18, %c0_19] : memref<1x1xf32, #tpu.memory_space<vmem>>, vector<1x1xf32>
      tpu.vector_store %arg4[%c0_18, %c0_19], %28 {strides = array<i32>} : memref<1x1xf32, #tpu.memory_space<vmem>>, vector<1x1xf32>,
    } else {
    }
    return
  }
  func.func @transform_0(%arg0: i32) -> (i32, i32) {
    %c0_i32 = arith.constant 0 : i32
    %c0_i32_0 = arith.constant 0 : i32
    %c0_i32_1 = arith.constant 0 : i32
    return %c0_i32, %c0_i32_0 : i32, i32
  }
  func.func @transform_1(%arg0: i32) -> (i32, i32) {
    %c0_i32 = arith.constant 0 : i32
    %c0_i32_0 = arith.constant 0 : i32
    return %arg0, %c0_i32 : i32, i32
  }
  func.func @transform_2(%arg0: i32) -> (i32, i32) {
    %c0_i32 = arith.constant 0 : i32
    %c0_i32_0 = arith.constant 0 : i32
    return %arg0, %c0_i32 : i32, i32
  }
  func.func @transform_3(%arg0: i32) -> (i32, i32) {
    %c0_i32 = arith.constant 0 : i32
    %c0_i32_0 = arith.constant 0 : i32
    %c0_i32_1 = arith.constant 0 : i32
    return %c0_i32, %c0_i32_0 : i32, i32
  }
}

</mosaic_0001>

<llo_original>
// kernel: tpu_custom_call.1
$region0: #{tpu_custom_call.1}
  #allocation0 [shape = 'u32[]', space=smem, size = 0x4, offset = 0x4, fixed_abs, tag = 'smem constant byte address 0x4 - core index']
  #allocation1 [shape = 'u32[144,128]{1,0:T(1,128)}', space=vmem, size = 0x12000, scoped, tag = 'internal scratch']
  #allocation2 [shape = 'f32[1,128]{1,0:T(1,128)}', space=vmem, size = 0x200, scoped, tag = 'scratch operand']
  %s0 = inlined_call_operand.hbm [shape: f32[1,128], index: 0, kind: input, shape index: {}]
  %s1 = inlined_call_operand.vmem [shape: f32[1,128], index: 1, kind: input, shape index: {}]
  %s2 = inlined_call_operand.vmem [shape: f32[1,128], index: 2, kind: input, shape index: {}]
  %s3 = inlined_call_operand.hbm [shape: f32[1,1], index: 3, kind: output, shape index: {}]
  %s4 = sld [smem:[#allocation0]]
  $region34: #{tpu_custom_call.1} parent=0
    _
  %s6 = ssub.s32 1, %s4
  %s7 = scalar_select 0, %s6, %s4
  $region1: #{tpu_custom_call.1} parent=0
    #allocation3 [shape = 'u8[512]{0}', space=vmem, size = 0x400, scoped, tag = 'input window, operand 0, single buffered']
    #allocation4 [shape = 's32[1]{0}', space=sflag, size = 0x4, scoped, tag = 'scoped memory for tpu_custom_call.1']
    #allocation5 [shape = 's32[1]{0}', space=sflag, size = 0x4, scoped, tag = 'scoped memory for tpu_custom_call.1']
    #allocation6 [shape = 'u8[512]{0}', space=vmem, size = 0x400, scoped, tag = 'output window, operand 0, single buffered']
    %8 = vsyncpa [#allocation4], 0
    %9 = vsyncpa [#allocation5], 0
    // Predicated region
    $region2: #{tpu_custom_call.1} parent=1 // pred_check
      _
    $region3: #{tpu_custom_call.1} parent=1 // pred_check_branch
      %11 = sbr.rel (0) target = $region5
    $region4: #{tpu_custom_call.1} parent=1 // pred_region
      %s13 = ssub.s32 16, 16
      %14 = vsyncadd [#allocation4], %s13
      %s16 = sshll.u32 [#allocation3], 4
      %s17 = int_to_ptr.vmem [resolvable:$true] %s16
      %19 = dma.hbm_to_vmem [thread:$0]  %s0, 16, %s17, [#allocation4]
    $region5: #{tpu_custom_call.1} parent=1 // pred_fallthru
      _
    // Predicated region
    $region6: #{tpu_custom_call.1} parent=1 // pred_check
      _
    $region7: #{tpu_custom_call.1} parent=1 // pred_check_branch
      %21 = sbr.rel (0) target = $region9
    $region8: #{tpu_custom_call.1} parent=1 // pred_region
      _
    $region9: #{tpu_custom_call.1} parent=1 // pred_fallthru
      _
    // Predicated region
    $region10: #{tpu_custom_call.1} parent=1 // pred_check
      _
    $region11: #{tpu_custom_call.1} parent=1 // pred_check_branch
      %23 = sbr.rel (0) target = $region13
    $region12: #{tpu_custom_call.1} parent=1 // pred_region
      _
    $region13: #{tpu_custom_call.1} parent=1 // pred_fallthru
      _
    // Predicated region
    $region14: #{tpu_custom_call.1} parent=1 // pred_check
      _
    $region15: #{tpu_custom_call.1} parent=1 // pred_check_branch
      %25 = sbr.rel (0) target = $region17
    $region16: #{tpu_custom_call.1} parent=1 // pred_region
      %26 = dma.done [#allocation4], 16
    $region17: #{tpu_custom_call.1} parent=1 // pred_fallthru
      _
    %p27 = scmp.eq.s32.totalorder 0, 0
    // Predicated region
    $region18: #{tpu_custom_call.1} parent=1 // pred_check
      %p28 = pneg %p27
    $region19: #{tpu_custom_call.1} parent=1 // pred_check_branch
      %30 = sbr.rel (%p28) target = $region21
    $region20: #{tpu_custom_call.1} parent=1 // pred_region
      %31 = vst [vmem:[#allocation2] sm:$0x1] 0.0
    $region21: #{tpu_custom_call.1} parent=1 // pred_fallthru
      _
    %v32 = vld [vmem:[%s1] sm:$0x1]
    %v33 = vld [vmem:[%s2] sm:$0x1]
    %v34 = vld [vmem:[#allocation3] sm:$0x1]
    %v35 = vsub.f32 %v33, %v32
    %v36 = vmul.f32 %v34, %v35
    %v37 = vsub.f32 0.0, %v35
    %v38 = vmax.f32 %v37, 0.0
    %v39 = vadd.f32 %v36, %v38
    %v40 = vld [vmem:[#allocation2] sm:$0x1]
    %v41 = vadd.f32 %v39, 0.0
    %v42 = vadd.f32 %v40, %v41
    %43 = vst [vmem:[#allocation2] sm:$0x1] %v42
    // Predicated region
    $region22: #{tpu_custom_call.1} parent=1 // pred_check
      %p44 = pneg %p27
    $region23: #{tpu_custom_call.1} parent=1 // pred_check_branch
      %46 = sbr.rel (%p44) target = $region25
    $region24: #{tpu_custom_call.1} parent=1 // pred_region
      %v47 = vld [vmem:[#allocation2] sm:$0x1]
      %vm48 = vcmask 1040384
      %v49 = vsel %vm48, %v47, 0.0
      %50 = vadd.xlane.f32.xlu0 %v49
      %v51 = vpop.xlane.xlu0 %50
      %v52 = vrot.slane %v51, 4
      %v53 = vadd.f32 %v51, %v52
      %v54 = vrot.slane %v53, 2
      %v55 = vadd.f32 %v53, %v54
      %v56 = vrot.slane %v55, 1
      %v57 = vadd.f32 %v55, %v56
      %s58 = vtos %v57
      %v59 = vstv %s58
      %v60 = vmul.f32 %v59, 0.0625
      %vm61 = vcmask 0
      %62 = vst.msk [vmem:[#allocation6] sm:$0x1] %vm61, %v60
    $region25: #{tpu_custom_call.1} parent=1 // pred_fallthru
      _
    // Predicated region
    $region26: #{tpu_custom_call.1} parent=1 // pred_check
      _
    $region27: #{tpu_custom_call.1} parent=1 // pred_check_branch
      %64 = sbr.rel (0) target = $region29
    $region28: #{tpu_custom_call.1} parent=1 // pred_region
      %s66 = ssub.s32 16, 16
      %67 = vsyncadd [#allocation5], %s66
      %s69 = sshll.u32 [#allocation6], 4
      %s70 = int_to_ptr.vmem [resolvable:$true] %s69
      %72 = dma.vmem_to_hbm [thread:$0]  %s70, 16, %s3, [#allocation5]
    $region29: #{tpu_custom_call.1} parent=1 // pred_fallthru
      _
    // Predicated region
    $region30: #{tpu_custom_call.1} parent=1 // pred_check
      _
    $region31: #{tpu_custom_call.1} parent=1 // pred_check_branch
      %74 = sbr.rel (0) target = $region33
    $region32: #{tpu_custom_call.1} parent=1 // pred_region
      %75 = dma.done [#allocation5], 16
    $region33: #{tpu_custom_call.1} parent=1 // pred_fallthru
      _
    %76 = vsyncpa [#allocation4], 1
    %77 = vsyncpa [#allocation5], 1

</llo_original>
